<compile_context>
chip_gen: v7x
topology: tpu7x:2x2x1
jax: 0.10.0
libtpu: 0.0.40
codegen_flags: <defaults>
</compile_context>

<pallas_src>
import functools

import jax
import jax.numpy as jnp
from jax.experimental import pallas as pl
from jax.experimental.pallas import tpu as pltpu


def _ceil_to(x: int, m: int) -> int:
    return ((x + m - 1) // m) * m


def _mlp_feature_kernel(x_ref,
                        w1_ref, s1_ref, c1_ref,
                        w2_ref, s2_ref, c2_ref,
                        w3_ref, s3_ref, c3_ref,
                        o_ref, *, inv_t, compute_dtype):
    """One batch tile: 3x (matmul -> folded BN -> ELU) -> row-wise L2 normalize."""

    def dense_bn_elu(h, w_ref, s_ref, c_ref):
        # MXU matmul with f32 accumulation; BN(eval) + linear bias folded into scale/shift.
        y = jnp.dot(h.astype(compute_dtype), w_ref[...],
                    preferred_element_type=jnp.float32)
        y = y * s_ref[...] + c_ref[...]
        # ELU(alpha=1): x if x > 0 else exp(x) - 1  (exp runs on the EUP slot).
        return jnp.where(y > 0.0, y, jnp.exp(jnp.minimum(y, 0.0)) - 1.0)

    h = dense_bn_elu(x_ref[...].astype(jnp.float32), w1_ref, s1_ref, c1_ref)
    h = dense_bn_elu(h, w2_ref, s2_ref, c2_ref)
    h = dense_bn_elu(h, w3_ref, s3_ref, c3_ref)

    # Fx_Normalization: fx / ((||fx||_2 + 1e-8) * t)
    sq = jnp.sum(h * h, axis=-1, keepdims=True)        # (tb, 1)
    inv = inv_t / (jnp.sqrt(sq) + 1e-8)                 # one sqrt + one divide per ROW
    o_ref[...] = (h * inv).astype(o_ref.dtype)          # broadcast multiply per element


def fold_params(layers, *, bn_eps=1e-5, compute_dtype=jnp.float32):
    """layers: list of dicts with PyTorch-layout params per block:
         weight (out,in), bias (out,), gamma, beta, running_mean, running_var (out,).
       Returns per-layer (w_t, scale, shift) so the kernel computes
         (x @ w_t) * scale + shift  ==  BatchNorm1d(eval)(Linear(x)).
       Done once, outside the hot path (transpose + BN folding + optional bf16 cast)."""
    folded = []
    for p in layers:
        s = p["gamma"] / jnp.sqrt(p["running_var"] + bn_eps)          # (out,)
        shift = (p["bias"] - p["running_mean"]) * s + p["beta"]       # (out,)
        w_t = jnp.asarray(p["weight"]).T.astype(compute_dtype)        # (in, out)
        folded.append((w_t,
                       s.reshape(1, -1).astype(jnp.float32),
                       shift.reshape(1, -1).astype(jnp.float32)))
    return folded


def mlp_feature_forward(x, folded_params, *, t=0.1, tb=256):
    """x: (B, input_dim) f32; folded_params: output of fold_params (3 layers)."""
    B, input_dim = x.shape
    feature_dim = folded_params[-1][0].shape[1]
    compute_dtype = folded_params[0][0].dtype

    # Large batch tile (amortizes grid-step overhead, feeds MXU rows); multiple of 8
    # sublanes; pad the batch so no ragged tile is needed.
    tb_eff = _ceil_to(min(tb, _ceil_to(B, 8)), 8)
    Bp = _ceil_to(B, tb_eff)
    xp = x if Bp == B else jnp.pad(x, ((0, Bp - B), (0, 0)))

    flat_params, param_shapes = [], []
    for (w, s, c) in folded_params:
        flat_params += [w, s, c]
        param_shapes += [w.shape, s.shape, c.shape]

    # VMEM budget: weights (2x in case the single-buffer request falls back) + pipelined
    # x/out tiles + intermediate f32 activations, with headroom.
    w_bytes = sum(int(a.size) * a.dtype.itemsize for a in flat_params)
    act_bytes = 4 * tb_eff * (6 * input_dim + 2 * feature_dim)
    vmem_limit = int(min(max(2 * w_bytes + act_bytes + (8 << 20), 32 << 20), 100 << 20))

    n_elu = 2 * input_dim + feature_dim
    cost = pl.CostEstimate(
        flops=int(2 * Bp * input_dim * (2 * input_dim + feature_dim) + 8 * Bp * n_elu),
        transcendentals=int(Bp * (n_elu + 1)),
        bytes_accessed=int(xp.size * 4 + Bp * feature_dim * 4 + w_bytes),
    )

    kernel = functools.partial(_mlp_feature_kernel, inv_t=1.0 / float(t),
                               compute_dtype=compute_dtype)

    def build(single_buffer_weights):
        def const_spec(shape):
            idx = lambda i: (0, 0)
            if single_buffer_weights:
                # Grid-invariant operand: one VMEM copy is enough (v7x VMEM saver).
                return pl.BlockSpec(shape, idx, pipeline_mode=pl.Buffered(1))
            return pl.BlockSpec(shape, idx)

        in_specs = [pl.BlockSpec((tb_eff, input_dim), lambda i: (i, 0))]
        in_specs += [const_spec(shape) for shape in param_shapes]

        return pl.pallas_call(
            kernel,
            out_shape=jax.ShapeDtypeStruct((Bp, feature_dim), x.dtype),
            grid_spec=pltpu.PrefetchScalarGridSpec(
                num_scalar_prefetch=0,
                grid=(Bp // tb_eff,),
                in_specs=in_specs,
                out_specs=pl.BlockSpec((tb_eff, feature_dim), lambda i: (i, 0)),
            ),
            compiler_params=pltpu.CompilerParams(
                dimension_semantics=("parallel",),
                vmem_limit_bytes=vmem_limit,
            ),
            cost_estimate=cost,
        )

    try:
        out = build(True)(xp, *flat_params)
    except Exception:
        # Some Pallas builds reject pipeline_mode on pallas_call BlockSpecs; fall back
        # to default double-buffering (identical results, slightly more VMEM).
        out = build(False)(xp, *flat_params)

    return out[:B]


if __name__ == "__main__":
    B, input_dim, feature_dim, t = 16, 32, 16, 0.1

    key = jax.random.PRNGKey(0)
    layers = []
    for (d_in, d_out) in [(input_dim, input_dim),
                          (input_dim, input_dim),
                          (input_dim, feature_dim)]:
        key, kw, kb, kg, kbe, km, kv = jax.random.split(key, 7)
        bound = 1.0 / (d_in ** 0.5)
        layers.append(dict(
            weight=jax.random.uniform(kw, (d_out, d_in), minval=-bound, maxval=bound,
                                      dtype=jnp.float32),
            bias=jax.random.uniform(kb, (d_out,), minval=-bound, maxval=bound,
                                    dtype=jnp.float32),
            gamma=jax.random.uniform(kg, (d_out,), minval=0.5, maxval=1.5,
                                     dtype=jnp.float32),
            beta=0.1 * jax.random.normal(kbe, (d_out,), dtype=jnp.float32),
            running_mean=0.1 * jax.random.normal(km, (d_out,), dtype=jnp.float32),
            running_var=jax.random.uniform(kv, (d_out,), minval=0.5, maxval=1.5,
                                           dtype=jnp.float32),
        ))

    key, kx = jax.random.split(key)
    x = jax.random.normal(kx, (B, input_dim), dtype=jnp.float32)

    # Pure-JAX reference: Linear -> BatchNorm1d(eval) -> ELU, x3; then Fx_Normalization.
    def ref_forward(x, layers, t, bn_eps=1e-5):
        h = x
        for p in layers:
            y = h @ p["weight"].T + p["bias"]
            y = (y - p["running_mean"]) / jnp.sqrt(p["running_var"] + bn_eps) \
                * p["gamma"] + p["beta"]
            h = jnp.where(y > 0.0, y, jnp.exp(jnp.minimum(y, 0.0)) - 1.0)
        norm = jnp.sqrt(jnp.sum(h * h, axis=1, keepdims=True)) + 1e-8
        return h / (norm * t)

    ref = ref_forward(x, layers, t)

    # f32 weights: exact semantics of the module (eval-mode BN).
    params_f32 = fold_params(layers, compute_dtype=jnp.float32)
    out = jax.block_until_ready(mlp_feature_forward(x, params_f32, t=t))
    assert out.shape == (B, feature_dim)
    assert jnp.allclose(out, ref, atol=2e-4, rtol=2e-4), "f32 kernel mismatch vs reference"

    # bf16 weights / f32 accumulation: bandwidth-optimized path, looser tolerance.
    params_bf16 = fold_params(layers, compute_dtype=jnp.bfloat16)
    out_bf16 = jax.block_until_ready(mlp_feature_forward(x, params_bf16, t=t))
    assert jnp.allclose(out_bf16, ref, atol=5e-2, rtol=5e-2), "bf16 kernel mismatch vs reference"

    print("KERNEL_OK")
</pallas_src>

<mosaic_0001>
module attributes {stable_mosaic.version = 11 : i64} {
  func.func @_mlp_feature_kernel(%arg0: i32, %arg1: memref<16x32xf32, #tpu.memory_space<vmem>>, %arg2: memref<32x32xf32, #tpu.memory_space<vmem>>, %arg3: memref<1x32xf32, #tpu.memory_space<vmem>>, %arg4: memref<1x32xf32, #tpu.memory_space<vmem>>, %arg5: memref<32x32xf32, #tpu.memory_space<vmem>>, %arg6: memref<1x32xf32, #tpu.memory_space<vmem>>, %arg7: memref<1x32xf32, #tpu.memory_space<vmem>>, %arg8: memref<32x16xf32, #tpu.memory_space<vmem>>, %arg9: memref<1x16xf32, #tpu.memory_space<vmem>>, %arg10: memref<1x16xf32, #tpu.memory_space<vmem>>, %arg11: memref<16x16xf32, #tpu.memory_space<vmem>>) attributes {dimension_semantics = [#tpu.dimension_semantics<parallel>], iteration_bounds = array<i64: 1>, scalar_prefetch = 0 : i64, scratch_operands = 0 : i64, tpu.core_type = #tpu.core_type<tc>, window_params = [{transform_indices = @transform_0, window_bounds = array<i64: 16, 32>}, {pipeline_mode = #tpu.pipeline_mode<synchronous>, transform_indices = @transform_1, window_bounds = array<i64: 32, 32>}, {pipeline_mode = #tpu.pipeline_mode<synchronous>, transform_indices = @transform_2, window_bounds = array<i64: 1, 32>}, {pipeline_mode = #tpu.pipeline_mode<synchronous>, transform_indices = @transform_3, window_bounds = array<i64: 1, 32>}, {pipeline_mode = #tpu.pipeline_mode<synchronous>, transform_indices = @transform_4, window_bounds = array<i64: 32, 32>}, {pipeline_mode = #tpu.pipeline_mode<synchronous>, transform_indices = @transform_5, window_bounds = array<i64: 1, 32>}, {pipeline_mode = #tpu.pipeline_mode<synchronous>, transform_indices = @transform_6, window_bounds = array<i64: 1, 32>}, {pipeline_mode = #tpu.pipeline_mode<synchronous>, transform_indices = @transform_7, window_bounds = array<i64: 32, 16>}, {pipeline_mode = #tpu.pipeline_mode<synchronous>, transform_indices = @transform_8, window_bounds = array<i64: 1, 16>}, {pipeline_mode = #tpu.pipeline_mode<synchronous>, transform_indices = @transform_9, window_bounds = array<i64: 1, 16>}, {transform_indices = @transform_10, window_bounds = array<i64: 16, 16>}]} {
    %c0 = arith.constant 0 : index
    %c0_0 = arith.constant 0 : index
    %0 = vector.load %arg1[%c0, %c0_0] : memref<16x32xf32, #tpu.memory_space<vmem>>, vector<16x32xf32>
    %c0_1 = arith.constant 0 : index
    %c0_2 = arith.constant 0 : index
    %1 = vector.load %arg2[%c0_1, %c0_2] : memref<32x32xf32, #tpu.memory_space<vmem>>, vector<32x32xf32>
    %cst = arith.constant dense<0.000000e+00> : vector<16x32xf32>
    %2 = tpu.matmul %0, %1, %cst {dimension_numbers = #tpu.dot_dimension_numbers<[1], [0], [0], [1], [0, 0, 1, 1], [], []>} : vector<16x32xf32>, vector<32x32xf32>, vector<16x32xf32> -> vector<16x32xf32>
    %c0_3 = arith.constant 0 : index
    %c0_4 = arith.constant 0 : index
    %3 = vector.load %arg3[%c0_3, %c0_4] : memref<1x32xf32, #tpu.memory_space<vmem>>, vector<1x32xf32>
    %4 = vector.broadcast %3 : vector<1x32xf32> to vector<16x32xf32>
    %5 = arith.mulf %2, %4 : vector<16x32xf32>
    %c0_5 = arith.constant 0 : index
    %c0_6 = arith.constant 0 : index
    %6 = vector.load %arg4[%c0_5, %c0_6] : memref<1x32xf32, #tpu.memory_space<vmem>>, vector<1x32xf32>
    %7 = vector.broadcast %6 : vector<1x32xf32> to vector<16x32xf32>
    %8 = arith.addf %5, %7 : vector<16x32xf32>
    %cst_7 = arith.constant 0.000000e+00 : f32
    %9 = vector.broadcast %cst_7 : f32 to vector<16x32xf32>
    %10 = arith.cmpf ogt, %8, %9 : vector<16x32xf32>
    %cst_8 = arith.constant 0.000000e+00 : f32
    %11 = vector.broadcast %cst_8 : f32 to vector<16x32xf32>
    %12 = arith.minimumf %8, %11 : vector<16x32xf32>
    %13 = math.exp %12 : vector<16x32xf32>
    %cst_9 = arith.constant 1.000000e+00 : f32
    %14 = vector.broadcast %cst_9 : f32 to vector<16x32xf32>
    %15 = arith.subf %13, %14 : vector<16x32xf32>
    %16 = arith.select %10, %8, %15 : vector<16x32xi1>, vector<16x32xf32>
    %c0_10 = arith.constant 0 : index
    %c0_11 = arith.constant 0 : index
    %17 = vector.load %arg5[%c0_10, %c0_11] : memref<32x32xf32, #tpu.memory_space<vmem>>, vector<32x32xf32>
    %cst_12 = arith.constant dense<0.000000e+00> : vector<16x32xf32>
    %18 = tpu.matmul %16, %17, %cst_12 {dimension_numbers = #tpu.dot_dimension_numbers<[1], [0], [0], [1], [0, 0, 1, 1], [], []>} : vector<16x32xf32>, vector<32x32xf32>, vector<16x32xf32> -> vector<16x32xf32>
    %c0_13 = arith.constant 0 : index
    %c0_14 = arith.constant 0 : index
    %19 = vector.load %arg6[%c0_13, %c0_14] : memref<1x32xf32, #tpu.memory_space<vmem>>, vector<1x32xf32>
    %20 = vector.broadcast %19 : vector<1x32xf32> to vector<16x32xf32>
    %21 = arith.mulf %18, %20 : vector<16x32xf32>
    %c0_15 = arith.constant 0 : index
    %c0_16 = arith.constant 0 : index
    %22 = vector.load %arg7[%c0_15, %c0_16] : memref<1x32xf32, #tpu.memory_space<vmem>>, vector<1x32xf32>
    %23 = vector.broadcast %22 : vector<1x32xf32> to vector<16x32xf32>
    %24 = arith.addf %21, %23 : vector<16x32xf32>
    %cst_17 = arith.constant 0.000000e+00 : f32
    %25 = vector.broadcast %cst_17 : f32 to vector<16x32xf32>
    %26 = arith.cmpf ogt, %24, %25 : vector<16x32xf32>
    %cst_18 = arith.constant 0.000000e+00 : f32
    %27 = vector.broadcast %cst_18 : f32 to vector<16x32xf32>
    %28 = arith.minimumf %24, %27 : vector<16x32xf32>
    %29 = math.exp %28 : vector<16x32xf32>
    %cst_19 = arith.constant 1.000000e+00 : f32
    %30 = vector.broadcast %cst_19 : f32 to vector<16x32xf32>
    %31 = arith.subf %29, %30 : vector<16x32xf32>
    %32 = arith.select %26, %24, %31 : vector<16x32xi1>, vector<16x32xf32>
    %c0_20 = arith.constant 0 : index
    %c0_21 = arith.constant 0 : index
    %33 = vector.load %arg8[%c0_20, %c0_21] : memref<32x16xf32, #tpu.memory_space<vmem>>, vector<32x16xf32>
    %cst_22 = arith.constant dense<0.000000e+00> : vector<16x16xf32>
    %34 = tpu.matmul %32, %33, %cst_22 {dimension_numbers = #tpu.dot_dimension_numbers<[1], [0], [0], [1], [0, 0, 1, 1], [], []>} : vector<16x32xf32>, vector<32x16xf32>, vector<16x16xf32> -> vector<16x16xf32>
    %c0_23 = arith.constant 0 : index
    %c0_24 = arith.constant 0 : index
    %35 = vector.load %arg9[%c0_23, %c0_24] : memref<1x16xf32, #tpu.memory_space<vmem>>, vector<1x16xf32>
    %36 = vector.broadcast %35 : vector<1x16xf32> to vector<16x16xf32>
    %37 = arith.mulf %34, %36 : vector<16x16xf32>
    %c0_25 = arith.constant 0 : index
    %c0_26 = arith.constant 0 : index
    %38 = vector.load %arg10[%c0_25, %c0_26] : memref<1x16xf32, #tpu.memory_space<vmem>>, vector<1x16xf32>
    %39 = vector.broadcast %38 : vector<1x16xf32> to vector<16x16xf32>
    %40 = arith.addf %37, %39 : vector<16x16xf32>
    %cst_27 = arith.constant 0.000000e+00 : f32
    %41 = vector.broadcast %cst_27 : f32 to vector<16x16xf32>
    %42 = arith.cmpf ogt, %40, %41 : vector<16x16xf32>
    %cst_28 = arith.constant 0.000000e+00 : f32
    %43 = vector.broadcast %cst_28 : f32 to vector<16x16xf32>
    %44 = arith.minimumf %40, %43 : vector<16x16xf32>
    %45 = math.exp %44 : vector<16x16xf32>
    %cst_29 = arith.constant 1.000000e+00 : f32
    %46 = vector.broadcast %cst_29 : f32 to vector<16x16xf32>
    %47 = arith.subf %45, %46 : vector<16x16xf32>
    %48 = arith.select %42, %40, %47 : vector<16x16xi1>, vector<16x16xf32>
    %49 = arith.mulf %48, %48 : vector<16x16xf32>
    %cst_30 = arith.constant dense<0.000000e+00> : vector<16xf32>
    %50 = vector.multi_reduction <add>, %49, %cst_30 [1] : vector<16x16xf32> to vector<16xf32>
    %51 = vector.shape_cast %50 : vector<16xf32> to vector<16x1xf32>
    %52 = math.sqrt %51 : vector<16x1xf32>
    %cst_31 = arith.constant 9.99999993E-9 : f32
    %53 = vector.broadcast %cst_31 : f32 to vector<16x1xf32>
    %54 = arith.addf %52, %53 : vector<16x1xf32>
    %cst_32 = arith.constant 1.000000e+01 : f32
    %55 = vector.broadcast %cst_32 : f32 to vector<16x1xf32>
    %56 = arith.divf %55, %54 : vector<16x1xf32>
    %57 = vector.broadcast %56 : vector<16x1xf32> to vector<16x16xf32>
    %58 = arith.mulf %48, %57 : vector<16x16xf32>
    %c0_33 = arith.constant 0 : index
    %c0_34 = arith.constant 0 : index
    %59 = vector.load %arg11[%c0_33, %c0_34] : memref<16x16xf32, #tpu.memory_space<vmem>>, vector<16x16xf32>
    tpu.vector_store %arg11[%c0_33, %c0_34], %58 {strides = array<i32>} : memref<16x16xf32, #tpu.memory_space<vmem>>, vector<16x16xf32>,
    return
  }
  func.func @transform_0(%arg0: i32) -> (i32, i32) {
    %c0_i32 = arith.constant 0 : i32
    %c0_i32_0 = arith.constant 0 : i32
    return %arg0, %c0_i32 : i32, i32
  }
  func.func @transform_1(%arg0: i32) -> (i32, i32) {
    %c0_i32 = arith.constant 0 : i32
    %c0_i32_0 = arith.constant 0 : i32
    %c0_i32_1 = arith.constant 0 : i32
    return %c0_i32, %c0_i32_0 : i32, i32
  }
  func.func @transform_2(%arg0: i32) -> (i32, i32) {
    %c0_i32 = arith.constant 0 : i32
    %c0_i32_0 = arith.constant 0 : i32
    %c0_i32_1 = arith.constant 0 : i32
    return %c0_i32, %c0_i32_0 : i32, i32
  }
  func.func @transform_3(%arg0: i32) -> (i32, i32) {
    %c0_i32 = arith.constant 0 : i32
    %c0_i32_0 = arith.constant 0 : i32
    %c0_i32_1 = arith.constant 0 : i32
    return %c0_i32, %c0_i32_0 : i32, i32
  }
  func.func @transform_4(%arg0: i32) -> (i32, i32) {
    %c0_i32 = arith.constant 0 : i32
    %c0_i32_0 = arith.constant 0 : i32
    %c0_i32_1 = arith.constant 0 : i32
    return %c0_i32, %c0_i32_0 : i32, i32
  }
  func.func @transform_5(%arg0: i32) -> (i32, i32) {
    %c0_i32 = arith.constant 0 : i32
    %c0_i32_0 = arith.constant 0 : i32
    %c0_i32_1 = arith.constant 0 : i32
    return %c0_i32, %c0_i32_0 : i32, i32
  }
  func.func @transform_6(%arg0: i32) -> (i32, i32) {
    %c0_i32 = arith.constant 0 : i32
    %c0_i32_0 = arith.constant 0 : i32
    %c0_i32_1 = arith.constant 0 : i32
    return %c0_i32, %c0_i32_0 : i32, i32
  }
  func.func @transform_7(%arg0: i32) -> (i32, i32) {
    %c0_i32 = arith.constant 0 : i32
    %c0_i32_0 = arith.constant 0 : i32
    %c0_i32_1 = arith.constant 0 : i32
    return %c0_i32, %c0_i32_0 : i32, i32
  }
  func.func @transform_8(%arg0: i32) -> (i32, i32) {
    %c0_i32 = arith.constant 0 : i32
    %c0_i32_0 = arith.constant 0 : i32
    %c0_i32_1 = arith.constant 0 : i32
    return %c0_i32, %c0_i32_0 : i32, i32
  }
  func.func @transform_9(%arg0: i32) -> (i32, i32) {
    %c0_i32 = arith.constant 0 : i32
    %c0_i32_0 = arith.constant 0 : i32
    %c0_i32_1 = arith.constant 0 : i32
    return %c0_i32, %c0_i32_0 : i32, i32
  }
  func.func @transform_10(%arg0: i32) -> (i32, i32) {
    %c0_i32 = arith.constant 0 : i32
    %c0_i32_0 = arith.constant 0 : i32
    return %arg0, %c0_i32 : i32, i32
  }
}

module attributes {stable_mosaic.version = 11 : i64} {
  func.func @_mlp_feature_kernel(%arg0: i32, %arg1: memref<16x32xf32, #tpu.memory_space<vmem>>, %arg2: memref<32x32xf32, #tpu.memory_space<vmem>>, %arg3: memref<1x32xf32, #tpu.memory_space<vmem>>, %arg4: memref<1x32xf32, #tpu.memory_space<vmem>>, %arg5: memref<32x32xf32, #tpu.memory_space<vmem>>, %arg6: memref<1x32xf32, #tpu.memory_space<vmem>>, %arg7: memref<1x32xf32, #tpu.memory_space<vmem>>, %arg8: memref<32x16xf32, #tpu.memory_space<vmem>>, %arg9: memref<1x16xf32, #tpu.memory_space<vmem>>, %arg10: memref<1x16xf32, #tpu.memory_space<vmem>>, %arg11: memref<16x16xf32, #tpu.memory_space<vmem>>) attributes {dimension_semantics = [#tpu.dimension_semantics<parallel>], iteration_bounds = array<i64: 1>, scalar_prefetch = 0 : i64, scratch_operands = 0 : i64, tpu.core_type = #tpu.core_type<tc>, window_params = [{transform_indices = @transform_0, window_bounds = array<i64: 16, 32>}, {pipeline_mode = #tpu.pipeline_mode<synchronous>, transform_indices = @transform_1, window_bounds = array<i64: 32, 32>}, {pipeline_mode = #tpu.pipeline_mode<synchronous>, transform_indices = @transform_2, window_bounds = array<i64: 1, 32>}, {pipeline_mode = #tpu.pipeline_mode<synchronous>, transform_indices = @transform_3, window_bounds = array<i64: 1, 32>}, {pipeline_mode = #tpu.pipeline_mode<synchronous>, transform_indices = @transform_4, window_bounds = array<i64: 32, 32>}, {pipeline_mode = #tpu.pipeline_mode<synchronous>, transform_indices = @transform_5, window_bounds = array<i64: 1, 32>}, {pipeline_mode = #tpu.pipeline_mode<synchronous>, transform_indices = @transform_6, window_bounds = array<i64: 1, 32>}, {pipeline_mode = #tpu.pipeline_mode<synchronous>, transform_indices = @transform_7, window_bounds = array<i64: 32, 16>}, {pipeline_mode = #tpu.pipeline_mode<synchronous>, transform_indices = @transform_8, window_bounds = array<i64: 1, 16>}, {pipeline_mode = #tpu.pipeline_mode<synchronous>, transform_indices = @transform_9, window_bounds = array<i64: 1, 16>}, {transform_indices = @transform_10, window_bounds = array<i64: 16, 16>}]} {
    %c0 = arith.constant 0 : index
    %c0_0 = arith.constant 0 : index
    %0 = vector.load %arg1[%c0, %c0_0] : memref<16x32xf32, #tpu.memory_space<vmem>>, vector<16x32xf32>
    %c0_1 = arith.constant 0 : index
    %c0_2 = arith.constant 0 : index
    %1 = vector.load %arg2[%c0_1, %c0_2] : memref<32x32xf32, #tpu.memory_space<vmem>>, vector<32x32xf32>
    %cst = arith.constant dense<0.000000e+00> : vector<16x32xf32>
    %2 = tpu.matmul %0, %1, %cst {dimension_numbers = #tpu.dot_dimension_numbers<[1], [0], [0], [1], [0, 0, 1, 1], [], []>} : vector<16x32xf32>, vector<32x32xf32>, vector<16x32xf32> -> vector<16x32xf32>
    %c0_3 = arith.constant 0 : index
    %c0_4 = arith.constant 0 : index
    %3 = vector.load %arg3[%c0_3, %c0_4] : memref<1x32xf32, #tpu.memory_space<vmem>>, vector<1x32xf32>
    %4 = vector.broadcast %3 : vector<1x32xf32> to vector<16x32xf32>
    %5 = arith.mulf %2, %4 : vector<16x32xf32>
    %c0_5 = arith.constant 0 : index
    %c0_6 = arith.constant 0 : index
    %6 = vector.load %arg4[%c0_5, %c0_6] : memref<1x32xf32, #tpu.memory_space<vmem>>, vector<1x32xf32>
    %7 = vector.broadcast %6 : vector<1x32xf32> to vector<16x32xf32>
    %8 = arith.addf %5, %7 : vector<16x32xf32>
    %cst_7 = arith.constant 0.000000e+00 : f32
    %9 = vector.broadcast %cst_7 : f32 to vector<16x32xf32>
    %10 = arith.cmpf ogt, %8, %9 : vector<16x32xf32>
    %cst_8 = arith.constant 0.000000e+00 : f32
    %11 = vector.broadcast %cst_8 : f32 to vector<16x32xf32>
    %12 = arith.minimumf %8, %11 : vector<16x32xf32>
    %13 = math.exp %12 : vector<16x32xf32>
    %cst_9 = arith.constant 1.000000e+00 : f32
    %14 = vector.broadcast %cst_9 : f32 to vector<16x32xf32>
    %15 = arith.subf %13, %14 : vector<16x32xf32>
    %16 = arith.select %10, %8, %15 : vector<16x32xi1>, vector<16x32xf32>
    %c0_10 = arith.constant 0 : index
    %c0_11 = arith.constant 0 : index
    %17 = vector.load %arg5[%c0_10, %c0_11] : memref<32x32xf32, #tpu.memory_space<vmem>>, vector<32x32xf32>
    %cst_12 = arith.constant dense<0.000000e+00> : vector<16x32xf32>
    %18 = tpu.matmul %16, %17, %cst_12 {dimension_numbers = #tpu.dot_dimension_numbers<[1], [0], [0], [1], [0, 0, 1, 1], [], []>} : vector<16x32xf32>, vector<32x32xf32>, vector<16x32xf32> -> vector<16x32xf32>
    %c0_13 = arith.constant 0 : index
    %c0_14 = arith.constant 0 : index
    %19 = vector.load %arg6[%c0_13, %c0_14] : memref<1x32xf32, #tpu.memory_space<vmem>>, vector<1x32xf32>
    %20 = vector.broadcast %19 : vector<1x32xf32> to vector<16x32xf32>
    %21 = arith.mulf %18, %20 : vector<16x32xf32>
    %c0_15 = arith.constant 0 : index
    %c0_16 = arith.constant 0 : index
    %22 = vector.load %arg7[%c0_15, %c0_16] : memref<1x32xf32, #tpu.memory_space<vmem>>, vector<1x32xf32>
    %23 = vector.broadcast %22 : vector<1x32xf32> to vector<16x32xf32>
    %24 = arith.addf %21, %23 : vector<16x32xf32>
    %cst_17 = arith.constant 0.000000e+00 : f32
    %25 = vector.broadcast %cst_17 : f32 to vector<16x32xf32>
    %26 = arith.cmpf ogt, %24, %25 : vector<16x32xf32>
    %cst_18 = arith.constant 0.000000e+00 : f32
    %27 = vector.broadcast %cst_18 : f32 to vector<16x32xf32>
    %28 = arith.minimumf %24, %27 : vector<16x32xf32>
    %29 = math.exp %28 : vector<16x32xf32>
    %cst_19 = arith.constant 1.000000e+00 : f32
    %30 = vector.broadcast %cst_19 : f32 to vector<16x32xf32>
    %31 = arith.subf %29, %30 : vector<16x32xf32>
    %32 = arith.select %26, %24, %31 : vector<16x32xi1>, vector<16x32xf32>
    %c0_20 = arith.constant 0 : index
    %c0_21 = arith.constant 0 : index
    %33 = vector.load %arg8[%c0_20, %c0_21] : memref<32x16xf32, #tpu.memory_space<vmem>>, vector<32x16xf32>
    %cst_22 = arith.constant dense<0.000000e+00> : vector<16x16xf32>
    %34 = tpu.matmul %32, %33, %cst_22 {dimension_numbers = #tpu.dot_dimension_numbers<[1], [0], [0], [1], [0, 0, 1, 1], [], []>} : vector<16x32xf32>, vector<32x16xf32>, vector<16x16xf32> -> vector<16x16xf32>
    %c0_23 = arith.constant 0 : index
    %c0_24 = arith.constant 0 : index
    %35 = vector.load %arg9[%c0_23, %c0_24] : memref<1x16xf32, #tpu.memory_space<vmem>>, vector<1x16xf32>
    %36 = vector.broadcast %35 : vector<1x16xf32> to vector<16x16xf32>
    %37 = arith.mulf %34, %36 : vector<16x16xf32>
    %c0_25 = arith.constant 0 : index
    %c0_26 = arith.constant 0 : index
    %38 = vector.load %arg10[%c0_25, %c0_26] : memref<1x16xf32, #tpu.memory_space<vmem>>, vector<1x16xf32>
    %39 = vector.broadcast %38 : vector<1x16xf32> to vector<16x16xf32>
    %40 = arith.addf %37, %39 : vector<16x16xf32>
    %cst_27 = arith.constant 0.000000e+00 : f32
    %41 = vector.broadcast %cst_27 : f32 to vector<16x16xf32>
    %42 = arith.cmpf ogt, %40, %41 : vector<16x16xf32>
    %cst_28 = arith.constant 0.000000e+00 : f32
    %43 = vector.broadcast %cst_28 : f32 to vector<16x16xf32>
    %44 = arith.minimumf %40, %43 : vector<16x16xf32>
    %45 = math.exp %44 : vector<16x16xf32>
    %cst_29 = arith.constant 1.000000e+00 : f32
    %46 = vector.broadcast %cst_29 : f32 to vector<16x16xf32>
    %47 = arith.subf %45, %46 : vector<16x16xf32>
    %48 = arith.select %42, %40, %47 : vector<16x16xi1>, vector<16x16xf32>
    %49 = arith.mulf %48, %48 : vector<16x16xf32>
    %cst_30 = arith.constant dense<0.000000e+00> : vector<16xf32>
    %50 = vector.multi_reduction <add>, %49, %cst_30 [1] : vector<16x16xf32> to vector<16xf32>
    %51 = vector.shape_cast %50 : vector<16xf32> to vector<16x1xf32>
    %52 = math.sqrt %51 : vector<16x1xf32>
    %cst_31 = arith.constant 9.99999993E-9 : f32
    %53 = vector.broadcast %cst_31 : f32 to vector<16x1xf32>
    %54 = arith.addf %52, %53 : vector<16x1xf32>
    %cst_32 = arith.constant 1.000000e+01 : f32
    %55 = vector.broadcast %cst_32 : f32 to vector<16x1xf32>
    %56 = arith.divf %55, %54 : vector<16x1xf32>
    %57 = vector.broadcast %56 : vector<16x1xf32> to vector<16x16xf32>
    %58 = arith.mulf %48, %57 : vector<16x16xf32>
    %c0_33 = arith.constant 0 : index
    %c0_34 = arith.constant 0 : index
    %59 = vector.load %arg11[%c0_33, %c0_34] : memref<16x16xf32, #tpu.memory_space<vmem>>, vector<16x16xf32>
    tpu.vector_store %arg11[%c0_33, %c0_34], %58 {strides = array<i32>} : memref<16x16xf32, #tpu.memory_space<vmem>>, vector<16x16xf32>,
    return
  }
  func.func @transform_0(%arg0: i32) -> (i32, i32) {
    %c0_i32 = arith.constant 0 : i32
    %c0_i32_0 = arith.constant 0 : i32
    return %arg0, %c0_i32 : i32, i32
  }
  func.func @transform_1(%arg0: i32) -> (i32, i32) {
    %c0_i32 = arith.constant 0 : i32
    %c0_i32_0 = arith.constant 0 : i32
    %c0_i32_1 = arith.constant 0 : i32
    return %c0_i32, %c0_i32_0 : i32, i32
  }
  func.func @transform_2(%arg0: i32) -> (i32, i32) {
    %c0_i32 = arith.constant 0 : i32
    %c0_i32_0 = arith.constant 0 : i32
    %c0_i32_1 = arith.constant 0 : i32
    return %c0_i32, %c0_i32_0 : i32, i32
  }
  func.func @transform_3(%arg0: i32) -> (i32, i32) {
    %c0_i32 = arith.constant 0 : i32
    %c0_i32_0 = arith.constant 0 : i32
    %c0_i32_1 = arith.constant 0 : i32
    return %c0_i32, %c0_i32_0 : i32, i32
  }
  func.func @transform_4(%arg0: i32) -> (i32, i32) {
    %c0_i32 = arith.constant 0 : i32
    %c0_i32_0 = arith.constant 0 : i32
    %c0_i32_1 = arith.constant 0 : i32
    return %c0_i32, %c0_i32_0 : i32, i32
  }
  func.func @transform_5(%arg0: i32) -> (i32, i32) {
    %c0_i32 = arith.constant 0 : i32
    %c0_i32_0 = arith.constant 0 : i32
    %c0_i32_1 = arith.constant 0 : i32
    return %c0_i32, %c0_i32_0 : i32, i32
  }
  func.func @transform_6(%arg0: i32) -> (i32, i32) {
    %c0_i32 = arith.constant 0 : i32
    %c0_i32_0 = arith.constant 0 : i32
    %c0_i32_1 = arith.constant 0 : i32
    return %c0_i32, %c0_i32_0 : i32, i32
  }
  func.func @transform_7(%arg0: i32) -> (i32, i32) {
    %c0_i32 = arith.constant 0 : i32
    %c0_i32_0 = arith.constant 0 : i32
    %c0_i32_1 = arith.constant 0 : i32
    return %c0_i32, %c0_i32_0 : i32, i32
  }
  func.func @transform_8(%arg0: i32) -> (i32, i32) {
    %c0_i32 = arith.constant 0 : i32
    %c0_i32_0 = arith.constant 0 : i32
    %c0_i32_1 = arith.constant 0 : i32
    return %c0_i32, %c0_i32_0 : i32, i32
  }
  func.func @transform_9(%arg0: i32) -> (i32, i32) {
    %c0_i32 = arith.constant 0 : i32
    %c0_i32_0 = arith.constant 0 : i32
    %c0_i32_1 = arith.constant 0 : i32
    return %c0_i32, %c0_i32_0 : i32, i32
  }
  func.func @transform_10(%arg0: i32) -> (i32, i32) {
    %c0_i32 = arith.constant 0 : i32
    %c0_i32_0 = arith.constant 0 : i32
    return %arg0, %c0_i32 : i32, i32
  }
}

</mosaic_0001>

<llo_original>
// kernel: tpu_custom_call.1
$region0: #{tpu_custom_call.1}
  #allocation0 [shape = 'u32[]', space=smem, size = 0x4, offset = 0x4, fixed_abs, tag = 'smem constant byte address 0x4 - core index']
  #allocation1 [shape = 'u32[144,128]{1,0:T(1,128)}', space=vmem, size = 0x12000, scoped, tag = 'internal scratch']
  %s0 = inlined_call_operand.vmem [shape: f32[16,32], index: 0, kind: input, shape index: {}]
  %s1 = inlined_call_operand.vmem [shape: f32[32,32], index: 1, kind: input, shape index: {}]
  %s2 = inlined_call_operand.vmem [shape: f32[1,32], index: 2, kind: input, shape index: {}]
  %s3 = inlined_call_operand.vmem [shape: f32[1,32], index: 3, kind: input, shape index: {}]
  %s4 = inlined_call_operand.hbm [shape: f32[32,32], index: 4, kind: input, shape index: {}]
  %s5 = inlined_call_operand.vmem [shape: f32[1,32], index: 5, kind: input, shape index: {}]
  %s6 = inlined_call_operand.vmem [shape: f32[1,32], index: 6, kind: input, shape index: {}]
  %s7 = inlined_call_operand.vmem [shape: f32[32,16], index: 7, kind: input, shape index: {}]
  %s8 = inlined_call_operand.vmem [shape: f32[1,16], index: 8, kind: input, shape index: {}]
  %s9 = inlined_call_operand.vmem [shape: f32[1,16], index: 9, kind: input, shape index: {}]
  %s10 = inlined_call_operand.hbm [shape: f32[16,16], index: 10, kind: output, shape index: {}]
  %s11 = sld [smem:[#allocation0]]
  $region54: #{tpu_custom_call.1} parent=0
    _
  %s13 = ssub.s32 1, %s11
  %s14 = scalar_select 0, %s13, %s11
  $region1: #{tpu_custom_call.1} parent=0
    #allocation2 [shape = 'u8[16384]{0}', space=vmem, size = 0x4000, scoped, tag = 'input window, operand 4, single buffered']
    #allocation3 [shape = 's32[1]{0}', space=sflag, size = 0x4, scoped, tag = 'scoped memory for tpu_custom_call.1']
    #allocation4 [shape = 's32[1]{0}', space=sflag, size = 0x4, scoped, tag = 'scoped memory for tpu_custom_call.1']
    #allocation5 [shape = 'u8[8192]{0}', space=vmem, size = 0x2000, scoped, tag = 'output window, operand 0, single buffered']
    %15 = vsyncpa [#allocation3], 0
    %16 = vsyncpa [#allocation4], 0
    // Predicated region
    $region2: #{tpu_custom_call.1} parent=1 // pred_check
      _
    $region3: #{tpu_custom_call.1} parent=1 // pred_check_branch
      %18 = sbr.rel (0) target = $region5
    $region4: #{tpu_custom_call.1} parent=1 // pred_region
      _
    $region5: #{tpu_custom_call.1} parent=1 // pred_fallthru
      _
    // Predicated region
    $region6: #{tpu_custom_call.1} parent=1 // pred_check
      _
    $region7: #{tpu_custom_call.1} parent=1 // pred_check_branch
      %20 = sbr.rel (0) target = $region9
    $region8: #{tpu_custom_call.1} parent=1 // pred_region
      _
    $region9: #{tpu_custom_call.1} parent=1 // pred_fallthru
      _
    // Predicated region
    $region10: #{tpu_custom_call.1} parent=1 // pred_check
      _
    $region11: #{tpu_custom_call.1} parent=1 // pred_check_branch
      %22 = sbr.rel (0) target = $region13
    $region12: #{tpu_custom_call.1} parent=1 // pred_region
      _
    $region13: #{tpu_custom_call.1} parent=1 // pred_fallthru
      _
    // Predicated region
    $region14: #{tpu_custom_call.1} parent=1 // pred_check
      _
    $region15: #{tpu_custom_call.1} parent=1 // pred_check_branch
      %24 = sbr.rel (0) target = $region17
    $region16: #{tpu_custom_call.1} parent=1 // pred_region
      _
    $region17: #{tpu_custom_call.1} parent=1 // pred_fallthru
      _
    // Predicated region
    $region18: #{tpu_custom_call.1} parent=1 // pred_check
      _
    $region19: #{tpu_custom_call.1} parent=1 // pred_check_branch
      %26 = sbr.rel (0) target = $region21
    $region20: #{tpu_custom_call.1} parent=1 // pred_region
      %s28 = ssub.s32 512, 512
      %29 = vsyncadd [#allocation3], %s28
      %s30 = sshll.u32 [#allocation2], 4
      %s31 = int_to_ptr.vmem [resolvable:$true] %s30
      %36 = dma.hbm_to_vmem [thread:$0]  %s4, 512, %s31, [#allocation3], 128, 128, 8
    $region21: #{tpu_custom_call.1} parent=1 // pred_fallthru
      _
    // Predicated region
    $region22: #{tpu_custom_call.1} parent=1 // pred_check
      _
    $region23: #{tpu_custom_call.1} parent=1 // pred_check_branch
      %38 = sbr.rel (0) target = $region25
    $region24: #{tpu_custom_call.1} parent=1 // pred_region
      _
    $region25: #{tpu_custom_call.1} parent=1 // pred_fallthru
      _
    // Predicated region
    $region26: #{tpu_custom_call.1} parent=1 // pred_check
      _
    $region27: #{tpu_custom_call.1} parent=1 // pred_check_branch
      %40 = sbr.rel (0) target = $region29
    $region28: #{tpu_custom_call.1} parent=1 // pred_region
      _
    $region29: #{tpu_custom_call.1} parent=1 // pred_fallthru
      _
    // Predicated region
    $region30: #{tpu_custom_call.1} parent=1 // pred_check
      _
    $region31: #{tpu_custom_call.1} parent=1 // pred_check_branch
      %42 = sbr.rel (0) target = $region33
    $region32: #{tpu_custom_call.1} parent=1 // pred_region
      _
    $region33: #{tpu_custom_call.1} parent=1 // pred_fallthru
      _
    // Predicated region
    $region34: #{tpu_custom_call.1} parent=1 // pred_check
      _
    $region35: #{tpu_custom_call.1} parent=1 // pred_check_branch
      %44 = sbr.rel (0) target = $region37
    $region36: #{tpu_custom_call.1} parent=1 // pred_region
      _
    $region37: #{tpu_custom_call.1} parent=1 // pred_fallthru
      _
    // Predicated region
    $region38: #{tpu_custom_call.1} parent=1 // pred_check
      _
    $region39: #{tpu_custom_call.1} parent=1 // pred_check_branch
      %46 = sbr.rel (0) target = $region41
    $region40: #{tpu_custom_call.1} parent=1 // pred_region
      _
    $region41: #{tpu_custom_call.1} parent=1 // pred_fallthru
      _
    // Predicated region
    $region42: #{tpu_custom_call.1} parent=1 // pred_check
      _
    $region43: #{tpu_custom_call.1} parent=1 // pred_check_branch
      %48 = sbr.rel (0) target = $region45
    $region44: #{tpu_custom_call.1} parent=1 // pred_region
      %49 = dma.done [#allocation3], 512
    $region45: #{tpu_custom_call.1} parent=1 // pred_fallthru
      _
    %v50 = vld [vmem:[%s0] sm:$0xff]
    %v51 = vld [vmem:[%s0 + $0x8] sm:$0xff]
    %v52 = vld [vmem:[%s1] sm:$0xff]
    %v53 = vld [vmem:[%s1 + $0x8] sm:$0xff]
    %v54 = vld [vmem:[%s1 + $0x10] sm:$0xff]
    %v55 = vld [vmem:[%s1 + $0x18] sm:$0xff]
    %vm56 = vcmask 261120
    %v58 = vsel %vm56, %v50, 0
    %v61 = vsel %vm56, %v51, 0
    %63 = vmatprep.subr.mxu0 0.0
    %64 = vmatpush1.msra.mxu0 %v52
    %65 = vmatprep.subr.mxu0 0.0
    %66 = vmatpush1.msra.mxu0 %v53
    %67 = vmatprep.subr.mxu0 0.0
    %68 = vmatpush1.msra.mxu0 %v54
    %69 = vmatprep.subr.mxu0 0.0
    %70 = vmatpush1.msra.mxu0 %v55
    %71 = vmatprep.subr.mxu0 0.0
    %72 = vmatpush1.msra.mxu0 0.0
    %73 = vmatprep.subr.mxu0 0.0
    %74 = vmatpush1.msra.mxu0 0.0
    %75 = vmatprep.subr.mxu0 0.0
    %76 = vmatpush1.msra.mxu0 0.0
    %77 = vmatprep.subr.mxu0 0.0
    %78 = vmatpush1.msra.mxu0 0.0
    %79 = vmatprep.subr.mxu0 0.0
    %80 = vmatpush1.msra.mxu0 0.0
    %81 = vmatprep.subr.mxu0 0.0
    %82 = vmatpush1.msra.mxu0 0.0
    %83 = vmatprep.subr.mxu0 0.0
    %84 = vmatpush1.msra.mxu0 0.0
    %85 = vmatprep.subr.mxu0 0.0
    %86 = vmatpush1.msra.mxu0 0.0
    %87 = vmatprep.subr.mxu0 0.0
    %88 = vmatpush1.msra.mxu0 0.0
    %89 = vmatprep.subr.mxu0 0.0
    %90 = vmatpush1.msra.mxu0 0.0
    %91 = vmatprep.subr.mxu0 0.0
    %92 = vmatpush1.msra.mxu0 0.0
    %93 = vmatprep.subr.mxu0 0.0
    %94 = vmatpush1.msra.mxu0 0.0
    %95 = vmatprep.subr.mxu0 0.0
    %96 = vmatpush1.msra.mxu0 0.0
    %97 = vmatprep.subr.mxu0 0.0
    %98 = vmatpush1.msra.mxu0 0.0
    %99 = vmatprep.subr.mxu0 0.0
    %100 = vmatpush1.msra.mxu0 0.0
    %101 = vmatprep.subr.mxu0 0.0
    %102 = vmatpush1.msra.mxu0 0.0
    %103 = vmatprep.subr.mxu0 0.0
    %104 = vmatpush1.msra.mxu0 0.0
    %105 = vmatprep.subr.mxu0 0.0
    %106 = vmatpush1.msra.mxu0 0.0
    %107 = vmatprep.subr.mxu0 0.0
    %108 = vmatpush1.msra.mxu0 0.0
    %109 = vmatprep.subr.mxu0 0.0
    %110 = vmatpush1.msra.mxu0 0.0
    %111 = vmatprep.subr.mxu0 0.0
    %112 = vmatpush1.msra.mxu0 0.0
    %113 = vmatprep.subr.mxu0 0.0
    %114 = vmatpush1.msra.mxu0 0.0
    %115 = vmatprep.subr.mxu0 0.0
    %116 = vmatpush1.msra.mxu0 0.0
    %117 = vmatprep.subr.mxu0 0.0
    %118 = vmatpush1.msra.mxu0 0.0
    %119 = vmatprep.subr.mxu0 0.0
    %120 = vmatpush1.msra.mxu0 0.0
    %121 = vmatprep.subr.mxu0 0.0
    %122 = vmatpush1.msra.mxu0 0.0
    %123 = vmatprep.subr.mxu0 0.0
    %124 = vmatpush1.msra.mxu0 0.0
    %125 = vmatprep.subr.mxu0 0.0
    %126 = vmatpush1.msra.mxu0 0.0
    %127 = vmatprep.mubr.f32.mxu0 0.0
    %128 = vmatmul.mubr.f32.gmra.mrb[0].mxu0 %v58
    %v129 = vpop.f32.mrb[0].mxu0
    %v130 = vadd.f32 0.0, %v129
    %v131 = vpop.f32.mrb[0].mxu0
    %132 = vmatprep.mubr.f32.mxu0 0.0
    %133 = vmatmul.mubr.f32.gmra.mrb[0].mxu0 %v61
    %v134 = vpop.f32.mrb[0].mxu0
    %v135 = vadd.f32 0.0, %v134
    %v136 = vpop.f32.mrb[0].mxu0
    %137 = vdwg.mxu0
    %v138 = vld [vmem:[%s2] sm:$0x1]
    %v140 = vlaneseq
    %v141 = vshrl.u32 %v140, 7
    %v142 = vsub.s32 0, %v141
    %v143 = vrot.slane %v138, %v142
    %v145 = vmul.f32 %v130, %v143
    %v146 = vmul.f32 %v135, %v143
    %v147 = vld [vmem:[%s3] sm:$0x1]
    %v149 = vlaneseq
    %v150 = vshrl.u32 %v149, 7
    %v151 = vsub.s32 0, %v150
    %v152 = vrot.slane %v147, %v151
    %v154 = vadd.f32 %v145, %v152
    %v155 = vadd.f32 %v146, %v152
    %vm156 = vcmp.gt.f32.partialorder %v154, 0.0
    %vm157 = vcmp.gt.f32.partialorder %v155, 0.0
    %v158 = vmin.f32 %v154, 0.0
    %v159 = vmin.f32 %v155, 0.0
    %v160 = vmul.f32 %v158, 1.442695
    %v161 = vpow.pop %v160
    %v162 = vmul.f32 %v159, 1.442695
    %v163 = vpow.pop %v162
    %v164 = vsub.f32 %v161, 1.0
    %v165 = vsub.f32 %v163, 1.0
    %v166 = vsel %vm156, %v154, %v164
    %v167 = vsel %vm157, %v155, %v165
    %v168 = vld [vmem:[#allocation2] sm:$0xff]
    %v169 = vld [vmem:[#allocation2 + $0x8] sm:$0xff]
    %v170 = vld [vmem:[#allocation2 + $0x10] sm:$0xff]
    %v171 = vld [vmem:[#allocation2 + $0x18] sm:$0xff]
    %v173 = vsel %vm56, %v166, 0
    %v176 = vsel %vm56, %v167, 0
    %178 = vmatprep.subr.mxu0 0.0
    %179 = vmatpush1.msra.mxu0 %v168
    %180 = vmatprep.subr.mxu0 0.0
    %181 = vmatpush1.msra.mxu0 %v169
    %182 = vmatprep.subr.mxu0 0.0
    %183 = vmatpush1.msra.mxu0 %v170
    %184 = vmatprep.subr.mxu0 0.0
    %185 = vmatpush1.msra.mxu0 %v171
    %186 = vmatprep.subr.mxu0 0.0
    %187 = vmatpush1.msra.mxu0 0.0
    %188 = vmatprep.subr.mxu0 0.0
    %189 = vmatpush1.msra.mxu0 0.0
    %190 = vmatprep.subr.mxu0 0.0
    %191 = vmatpush1.msra.mxu0 0.0
    %192 = vmatprep.subr.mxu0 0.0
    %193 = vmatpush1.msra.mxu0 0.0
    %194 = vmatprep.subr.mxu0 0.0
    %195 = vmatpush1.msra.mxu0 0.0
    %196 = vmatprep.subr.mxu0 0.0
    %197 = vmatpush1.msra.mxu0 0.0
    %198 = vmatprep.subr.mxu0 0.0
    %199 = vmatpush1.msra.mxu0 0.0
    %200 = vmatprep.subr.mxu0 0.0
    %201 = vmatpush1.msra.mxu0 0.0
    %202 = vmatprep.subr.mxu0 0.0
    %203 = vmatpush1.msra.mxu0 0.0
    %204 = vmatprep.subr.mxu0 0.0
    %205 = vmatpush1.msra.mxu0 0.0
    %206 = vmatprep.subr.mxu0 0.0
    %207 = vmatpush1.msra.mxu0 0.0
    %208 = vmatprep.subr.mxu0 0.0
    %209 = vmatpush1.msra.mxu0 0.0
    %210 = vmatprep.subr.mxu0 0.0
    %211 = vmatpush1.msra.mxu0 0.0
    %212 = vmatprep.subr.mxu0 0.0
    %213 = vmatpush1.msra.mxu0 0.0
    %214 = vmatprep.subr.mxu0 0.0
    %215 = vmatpush1.msra.mxu0 0.0
    %216 = vmatprep.subr.mxu0 0.0
    %217 = vmatpush1.msra.mxu0 0.0
    %218 = vmatprep.subr.mxu0 0.0
    %219 = vmatpush1.msra.mxu0 0.0
    %220 = vmatprep.subr.mxu0 0.0
    %221 = vmatpush1.msra.mxu0 0.0
    %222 = vmatprep.subr.mxu0 0.0
    %223 = vmatpush1.msra.mxu0 0.0
    %224 = vmatprep.subr.mxu0 0.0
    %225 = vmatpush1.msra.mxu0 0.0
    %226 = vmatprep.subr.mxu0 0.0
    %227 = vmatpush1.msra.mxu0 0.0
    %228 = vmatprep.subr.mxu0 0.0
    %229 = vmatpush1.msra.mxu0 0.0
    %230 = vmatprep.subr.mxu0 0.0
    %231 = vmatpush1.msra.mxu0 0.0
    %232 = vmatprep.subr.mxu0 0.0
    %233 = vmatpush1.msra.mxu0 0.0
    %234 = vmatprep.subr.mxu0 0.0
    %235 = vmatpush1.msra.mxu0 0.0
    %236 = vmatprep.subr.mxu0 0.0
    %237 = vmatpush1.msra.mxu0 0.0
    %238 = vmatprep.subr.mxu0 0.0
    %239 = vmatpush1.msra.mxu0 0.0
    %240 = vmatprep.subr.mxu0 0.0
    %241 = vmatpush1.msra.mxu0 0.0
    %242 = vmatprep.mubr.f32.mxu0 0.0
    %243 = vmatmul.mubr.f32.gmra.mrb[0].mxu0 %v173
    %v244 = vpop.f32.mrb[0].mxu0
    %v245 = vadd.f32 0.0, %v244
    %v246 = vpop.f32.mrb[0].mxu0
    %247 = vmatprep.mubr.f32.mxu0 0.0
    %248 = vmatmul.mubr.f32.gmra.mrb[0].mxu0 %v176
    %v249 = vpop.f32.mrb[0].mxu0
    %v250 = vadd.f32 0.0, %v249
    %v251 = vpop.f32.mrb[0].mxu0
    %252 = vdwg.mxu0
    %v253 = vld [vmem:[%s5] sm:$0x1]
    %v255 = vlaneseq
    %v256 = vshrl.u32 %v255, 7
    %v257 = vsub.s32 0, %v256
    %v258 = vrot.slane %v253, %v257
    %v260 = vmul.f32 %v245, %v258
    %v261 = vmul.f32 %v250, %v258
    %v262 = vld [vmem:[%s6] sm:$0x1]
    %v264 = vlaneseq
    %v265 = vshrl.u32 %v264, 7
    %v266 = vsub.s32 0, %v265
    %v267 = vrot.slane %v262, %v266
    %v269 = vadd.f32 %v260, %v267
    %v270 = vadd.f32 %v261, %v267
    %vm271 = vcmp.gt.f32.partialorder %v269, 0.0
    %vm272 = vcmp.gt.f32.partialorder %v270, 0.0
    %v273 = vmin.f32 %v269, 0.0
    %v274 = vmin.f32 %v270, 0.0
    %v275 = vmul.f32 %v273, 1.442695
    %v276 = vpow.pop %v275
    %v277 = vmul.f32 %v274, 1.442695
    %v278 = vpow.pop %v277
    %v279 = vsub.f32 %v276, 1.0
    %v280 = vsub.f32 %v278, 1.0
    %v281 = vsel %vm271, %v269, %v279
    %v282 = vsel %vm272, %v270, %v280
    %v283 = vld [vmem:[%s7] sm:$0xff]
    %v284 = vld [vmem:[%s7 + $0x8] sm:$0xff]
    %v285 = vld [vmem:[%s7 + $0x10] sm:$0xff]
    %v286 = vld [vmem:[%s7 + $0x18] sm:$0xff]
    %v288 = vsel %vm56, %v281, 0
    %v291 = vsel %vm56, %v282, 0
    %293 = vmatprep.subr.mxu0 0.0
    %294 = vmatpush1.msra.mxu0 %v283
    %295 = vmatprep.subr.mxu0 0.0
    %296 = vmatpush1.msra.mxu0 %v284
    %297 = vmatprep.subr.mxu0 0.0
    %298 = vmatpush1.msra.mxu0 %v285
    %299 = vmatprep.subr.mxu0 0.0
    %300 = vmatpush1.msra.mxu0 %v286
    %301 = vmatprep.subr.mxu0 0.0
    %302 = vmatpush1.msra.mxu0 0.0
    %303 = vmatprep.subr.mxu0 0.0
    %304 = vmatpush1.msra.mxu0 0.0
    %305 = vmatprep.subr.mxu0 0.0
    %306 = vmatpush1.msra.mxu0 0.0
    %307 = vmatprep.subr.mxu0 0.0
    %308 = vmatpush1.msra.mxu0 0.0
    %309 = vmatprep.subr.mxu0 0.0
    %310 = vmatpush1.msra.mxu0 0.0
    %311 = vmatprep.subr.mxu0 0.0
    %312 = vmatpush1.msra.mxu0 0.0
    %313 = vmatprep.subr.mxu0 0.0
    %314 = vmatpush1.msra.mxu0 0.0
    %315 = vmatprep.subr.mxu0 0.0
    %316 = vmatpush1.msra.mxu0 0.0
    %317 = vmatprep.subr.mxu0 0.0
    %318 = vmatpush1.msra.mxu0 0.0
    %319 = vmatprep.subr.mxu0 0.0
    %320 = vmatpush1.msra.mxu0 0.0
    %321 = vmatprep.subr.mxu0 0.0
    %322 = vmatpush1.msra.mxu0 0.0
    %323 = vmatprep.subr.mxu0 0.0
    %324 = vmatpush1.msra.mxu0 0.0
    %325 = vmatprep.subr.mxu0 0.0
    %326 = vmatpush1.msra.mxu0 0.0
    %327 = vmatprep.subr.mxu0 0.0
    %328 = vmatpush1.msra.mxu0 0.0
    %329 = vmatprep.subr.mxu0 0.0
    %330 = vmatpush1.msra.mxu0 0.0
    %331 = vmatprep.subr.mxu0 0.0
    %332 = vmatpush1.msra.mxu0 0.0
    %333 = vmatprep.subr.mxu0 0.0
    %334 = vmatpush1.msra.mxu0 0.0
    %335 = vmatprep.subr.mxu0 0.0
    %336 = vmatpush1.msra.mxu0 0.0
    %337 = vmatprep.subr.mxu0 0.0
    %338 = vmatpush1.msra.mxu0 0.0
    %339 = vmatprep.subr.mxu0 0.0
    %340 = vmatpush1.msra.mxu0 0.0
    %341 = vmatprep.subr.mxu0 0.0
    %342 = vmatpush1.msra.mxu0 0.0
    %343 = vmatprep.subr.mxu0 0.0
    %344 = vmatpush1.msra.mxu0 0.0
    %345 = vmatprep.subr.mxu0 0.0
    %346 = vmatpush1.msra.mxu0 0.0
    %347 = vmatprep.subr.mxu0 0.0
    %348 = vmatpush1.msra.mxu0 0.0
    %349 = vmatprep.subr.mxu0 0.0
    %350 = vmatpush1.msra.mxu0 0.0
    %351 = vmatprep.subr.mxu0 0.0
    %352 = vmatpush1.msra.mxu0 0.0
    %353 = vmatprep.subr.mxu0 0.0
    %354 = vmatpush1.msra.mxu0 0.0
    %355 = vmatprep.subr.mxu0 0.0
    %356 = vmatpush1.msra.mxu0 0.0
    %357 = vmatprep.mubr.f32.mxu0 0.0
    %358 = vmatmul.mubr.f32.gmra.mrb[0].mxu0 %v288
    %v359 = vpop.f32.mrb[0].mxu0
    %v360 = vadd.f32 0.0, %v359
    %v361 = vpop.f32.mrb[0].mxu0
    %362 = vmatprep.mubr.f32.mxu0 0.0
    %363 = vmatmul.mubr.f32.gmra.mrb[0].mxu0 %v291
    %v364 = vpop.f32.mrb[0].mxu0
    %v365 = vadd.f32 0.0, %v364
    %v366 = vpop.f32.mrb[0].mxu0
    %367 = vdwg.mxu0
    %v368 = vld [vmem:[%s8] sm:$0x1]
    %v370 = vlaneseq
    %v371 = vshrl.u32 %v370, 7
    %v372 = vsub.s32 0, %v371
    %v373 = vrot.slane %v368, %v372
    %v375 = vmul.f32 %v360, %v373
    %v376 = vmul.f32 %v365, %v373
    %v377 = vld [vmem:[%s9] sm:$0x1]
    %v379 = vlaneseq
    %v380 = vshrl.u32 %v379, 7
    %v381 = vsub.s32 0, %v380
    %v382 = vrot.slane %v377, %v381
    %v384 = vadd.f32 %v375, %v382
    %v385 = vadd.f32 %v376, %v382
    %vm386 = vcmp.gt.f32.partialorder %v384, 0.0
    %vm387 = vcmp.gt.f32.partialorder %v385, 0.0
    %v388 = vmin.f32 %v384, 0.0
    %v389 = vmin.f32 %v385, 0.0
    %v390 = vmul.f32 %v388, 1.442695
    %v391 = vpow.pop %v390
    %v392 = vmul.f32 %v389, 1.442695
    %v393 = vpow.pop %v392
    %v394 = vsub.f32 %v391, 1.0
    %v395 = vsub.f32 %v393, 1.0
    %v396 = vsel %vm386, %v384, %v394
    %v397 = vsel %vm387, %v385, %v395
    %v398 = vmul.f32 %v396, %v396
    %v399 = vmul.f32 %v397, %v397
    %vm400 = vcmask 130048
    %v401 = vsel %vm400, %v398, 0.0
    %402 = vadd.xlane.f32.xlu0 %v401
    %v403 = vpop.xlane.xlu0 %402
    %v404 = vsel %vm400, %v399, 0.0
    %405 = vadd.xlane.f32.xlu0 %v404
    %v406 = vpop.xlane.xlu0 %405
    %v407 = vrsqrt.pop %v403
    %v408 = vmul.f32 %v403, %v407
    %vm409 = vcmp.eq.f32.partialorder %v403, inf
    %v410 = vsel %vm409, %v403, %v408
    %vm411 = vcmp.eq.f32.partialorder %v403, 0.0
    %v412 = vand.u32 %v403, 2147483648
    %v413 = vsel %vm411, %v412, %v410
    %v414 = vrsqrt.pop %v406
    %v415 = vmul.f32 %v406, %v414
    %vm416 = vcmp.eq.f32.partialorder %v406, inf
    %v417 = vsel %vm416, %v406, %v415
    %vm418 = vcmp.eq.f32.partialorder %v406, 0.0
    %v419 = vand.u32 %v406, 2147483648
    %v420 = vsel %vm418, %v419, %v417
    %v421 = vadd.f32 %v413, 1e-08
    %v422 = vadd.f32 %v420, 1e-08
    %v423 = vrcp.pop %v421
    %v424 = vmul.f32 10.0, %v423
    %v425 = vrcp.pop %v422
    %v426 = vmul.f32 10.0, %v425
    %v427 = vmul.f32 %v396, %v424
    %v428 = vmul.f32 %v397, %v426
    %429 = vst.msk [vmem:[#allocation5] sm:$0xff] %vm400, %v427
    %430 = vst.msk [vmem:[#allocation5 + $0x8] sm:$0xff] %vm400, %v428
    // Predicated region
    $region46: #{tpu_custom_call.1} parent=1 // pred_check
      _
    $region47: #{tpu_custom_call.1} parent=1 // pred_check_branch
      %432 = sbr.rel (0) target = $region49
    $region48: #{tpu_custom_call.1} parent=1 // pred_region
      %s434 = ssub.s32 256, 256
      %435 = vsyncadd [#allocation4], %s434
      %s436 = sshll.u32 [#allocation5], 4
      %s437 = int_to_ptr.vmem [resolvable:$true] %s436
      %442 = dma.vmem_to_hbm [thread:$0]  %s437, 256, %s10, [#allocation4], 128, 128, 8
    $region49: #{tpu_custom_call.1} parent=1 // pred_fallthru
      _
    // Predicated region
    $region50: #{tpu_custom_call.1} parent=1 // pred_check
      _
    $region51: #{tpu_custom_call.1} parent=1 // pred_check_branch
      %444 = sbr.rel (0) target = $region53
    $region52: #{tpu_custom_call.1} parent=1 // pred_region
      %445 = dma.done [#allocation4], 256
    $region53: #{tpu_custom_call.1} parent=1 // pred_fallthru
      _
    %446 = vsyncpa [#allocation3], 1
    %447 = vsyncpa [#allocation4], 1

// kernel: tpu_custom_call.1
$region0: #{tpu_custom_call.1}
  #allocation0 [shape = 'u32[]', space=smem, size = 0x4, offset = 0x4, fixed_abs, tag = 'smem constant byte address 0x4 - core index']
  #allocation1 [shape = 'u32[144,128]{1,0:T(1,128)}', space=vmem, size = 0x12000, scoped, tag = 'internal scratch']
  %s0 = inlined_call_operand.vmem [shape: f32[16,32], index: 0, kind: input, shape index: {}]
  %s1 = inlined_call_operand.vmem [shape: f32[32,32], index: 1, kind: input, shape index: {}]
  %s2 = inlined_call_operand.vmem [shape: f32[1,32], index: 2, kind: input, shape index: {}]
  %s3 = inlined_call_operand.vmem [shape: f32[1,32], index: 3, kind: input, shape index: {}]
  %s4 = inlined_call_operand.hbm [shape: f32[32,32], index: 4, kind: input, shape index: {}]
  %s5 = inlined_call_operand.vmem [shape: f32[1,32], index: 5, kind: input, shape index: {}]
  %s6 = inlined_call_operand.vmem [shape: f32[1,32], index: 6, kind: input, shape index: {}]
  %s7 = inlined_call_operand.vmem [shape: f32[32,16], index: 7, kind: input, shape index: {}]
  %s8 = inlined_call_operand.vmem [shape: f32[1,16], index: 8, kind: input, shape index: {}]
  %s9 = inlined_call_operand.vmem [shape: f32[1,16], index: 9, kind: input, shape index: {}]
  %s10 = inlined_call_operand.hbm [shape: f32[16,16], index: 10, kind: output, shape index: {}]
  %s11 = sld [smem:[#allocation0]]
  $region54: #{tpu_custom_call.1} parent=0
    _
  %s13 = ssub.s32 1, %s11
  %s14 = scalar_select 0, %s13, %s11
  $region1: #{tpu_custom_call.1} parent=0
    #allocation2 [shape = 'u8[16384]{0}', space=vmem, size = 0x4000, scoped, tag = 'input window, operand 4, single buffered']
    #allocation3 [shape = 's32[1]{0}', space=sflag, size = 0x4, scoped, tag = 'scoped memory for tpu_custom_call.1']
    #allocation4 [shape = 's32[1]{0}', space=sflag, size = 0x4, scoped, tag = 'scoped memory for tpu_custom_call.1']
    #allocation5 [shape = 'u8[8192]{0}', space=vmem, size = 0x2000, scoped, tag = 'output window, operand 0, single buffered']
    %15 = vsyncpa [#allocation3], 0
    %16 = vsyncpa [#allocation4], 0
    // Predicated region
    $region2: #{tpu_custom_call.1} parent=1 // pred_check
      _
    $region3: #{tpu_custom_call.1} parent=1 // pred_check_branch
      %18 = sbr.rel (0) target = $region5
    $region4: #{tpu_custom_call.1} parent=1 // pred_region
      _
    $region5: #{tpu_custom_call.1} parent=1 // pred_fallthru
      _
    // Predicated region
    $region6: #{tpu_custom_call.1} parent=1 // pred_check
      _
    $region7: #{tpu_custom_call.1} parent=1 // pred_check_branch
      %20 = sbr.rel (0) target = $region9
    $region8: #{tpu_custom_call.1} parent=1 // pred_region
      _
    $region9: #{tpu_custom_call.1} parent=1 // pred_fallthru
      _
    // Predicated region
    $region10: #{tpu_custom_call.1} parent=1 // pred_check
      _
    $region11: #{tpu_custom_call.1} parent=1 // pred_check_branch
      %22 = sbr.rel (0) target = $region13
    $region12: #{tpu_custom_call.1} parent=1 // pred_region
      _
    $region13: #{tpu_custom_call.1} parent=1 // pred_fallthru
      _
    // Predicated region
    $region14: #{tpu_custom_call.1} parent=1 // pred_check
      _
    $region15: #{tpu_custom_call.1} parent=1 // pred_check_branch
      %24 = sbr.rel (0) target = $region17
    $region16: #{tpu_custom_call.1} parent=1 // pred_region
      _
    $region17: #{tpu_custom_call.1} parent=1 // pred_fallthru
      _
    // Predicated region
    $region18: #{tpu_custom_call.1} parent=1 // pred_check
      _
    $region19: #{tpu_custom_call.1} parent=1 // pred_check_branch
      %26 = sbr.rel (0) target = $region21
    $region20: #{tpu_custom_call.1} parent=1 // pred_region
      %s28 = ssub.s32 512, 512
      %29 = vsyncadd [#allocation3], %s28
      %s30 = sshll.u32 [#allocation2], 4
      %s31 = int_to_ptr.vmem [resolvable:$true] %s30
      %36 = dma.hbm_to_vmem [thread:$0]  %s4, 512, %s31, [#allocation3], 128, 128, 8
    $region21: #{tpu_custom_call.1} parent=1 // pred_fallthru
      _
    // Predicated region
    $region22: #{tpu_custom_call.1} parent=1 // pred_check
      _
    $region23: #{tpu_custom_call.1} parent=1 // pred_check_branch
      %38 = sbr.rel (0) target = $region25
    $region24: #{tpu_custom_call.1} parent=1 // pred_region
      _
    $region25: #{tpu_custom_call.1} parent=1 // pred_fallthru
      _
    // Predicated region
    $region26: #{tpu_custom_call.1} parent=1 // pred_check
      _
    $region27: #{tpu_custom_call.1} parent=1 // pred_check_branch
      %40 = sbr.rel (0) target = $region29
    $region28: #{tpu_custom_call.1} parent=1 // pred_region
      _
    $region29: #{tpu_custom_call.1} parent=1 // pred_fallthru
      _
    // Predicated region
    $region30: #{tpu_custom_call.1} parent=1 // pred_check
      _
    $region31: #{tpu_custom_call.1} parent=1 // pred_check_branch
      %42 = sbr.rel (0) target = $region33
    $region32: #{tpu_custom_call.1} parent=1 // pred_region
      _
    $region33: #{tpu_custom_call.1} parent=1 // pred_fallthru
      _
    // Predicated region
    $region34: #{tpu_custom_call.1} parent=1 // pred_check
      _
    $region35: #{tpu_custom_call.1} parent=1 // pred_check_branch
      %44 = sbr.rel (0) target = $region37
    $region36: #{tpu_custom_call.1} parent=1 // pred_region
      _
    $region37: #{tpu_custom_call.1} parent=1 // pred_fallthru
      _
    // Predicated region
    $region38: #{tpu_custom_call.1} parent=1 // pred_check
      _
    $region39: #{tpu_custom_call.1} parent=1 // pred_check_branch
      %46 = sbr.rel (0) target = $region41
    $region40: #{tpu_custom_call.1} parent=1 // pred_region
      _
    $region41: #{tpu_custom_call.1} parent=1 // pred_fallthru
      _
    // Predicated region
    $region42: #{tpu_custom_call.1} parent=1 // pred_check
      _
    $region43: #{tpu_custom_call.1} parent=1 // pred_check_branch
      %48 = sbr.rel (0) target = $region45
    $region44: #{tpu_custom_call.1} parent=1 // pred_region
      %49 = dma.done [#allocation3], 512
    $region45: #{tpu_custom_call.1} parent=1 // pred_fallthru
      _
    %v50 = vld [vmem:[%s0] sm:$0xff]
    %v51 = vld [vmem:[%s0 + $0x8] sm:$0xff]
    %v52 = vld [vmem:[%s1] sm:$0xff]
    %v53 = vld [vmem:[%s1 + $0x8] sm:$0xff]
    %v54 = vld [vmem:[%s1 + $0x10] sm:$0xff]
    %v55 = vld [vmem:[%s1 + $0x18] sm:$0xff]
    %vm56 = vcmask 261120
    %v58 = vsel %vm56, %v50, 0
    %v61 = vsel %vm56, %v51, 0
    %63 = vmatprep.subr.mxu0 0.0
    %64 = vmatpush1.msra.mxu0 %v52
    %65 = vmatprep.subr.mxu0 0.0
    %66 = vmatpush1.msra.mxu0 %v53
    %67 = vmatprep.subr.mxu0 0.0
    %68 = vmatpush1.msra.mxu0 %v54
    %69 = vmatprep.subr.mxu0 0.0
    %70 = vmatpush1.msra.mxu0 %v55
    %71 = vmatprep.subr.mxu0 0.0
    %72 = vmatpush1.msra.mxu0 0.0
    %73 = vmatprep.subr.mxu0 0.0
    %74 = vmatpush1.msra.mxu0 0.0
    %75 = vmatprep.subr.mxu0 0.0
    %76 = vmatpush1.msra.mxu0 0.0
    %77 = vmatprep.subr.mxu0 0.0
    %78 = vmatpush1.msra.mxu0 0.0
    %79 = vmatprep.subr.mxu0 0.0
    %80 = vmatpush1.msra.mxu0 0.0
    %81 = vmatprep.subr.mxu0 0.0
    %82 = vmatpush1.msra.mxu0 0.0
    %83 = vmatprep.subr.mxu0 0.0
    %84 = vmatpush1.msra.mxu0 0.0
    %85 = vmatprep.subr.mxu0 0.0
    %86 = vmatpush1.msra.mxu0 0.0
    %87 = vmatprep.subr.mxu0 0.0
    %88 = vmatpush1.msra.mxu0 0.0
    %89 = vmatprep.subr.mxu0 0.0
    %90 = vmatpush1.msra.mxu0 0.0
    %91 = vmatprep.subr.mxu0 0.0
    %92 = vmatpush1.msra.mxu0 0.0
    %93 = vmatprep.subr.mxu0 0.0
    %94 = vmatpush1.msra.mxu0 0.0
    %95 = vmatprep.subr.mxu0 0.0
    %96 = vmatpush1.msra.mxu0 0.0
    %97 = vmatprep.subr.mxu0 0.0
    %98 = vmatpush1.msra.mxu0 0.0
    %99 = vmatprep.subr.mxu0 0.0
    %100 = vmatpush1.msra.mxu0 0.0
    %101 = vmatprep.subr.mxu0 0.0
    %102 = vmatpush1.msra.mxu0 0.0
    %103 = vmatprep.subr.mxu0 0.0
    %104 = vmatpush1.msra.mxu0 0.0
    %105 = vmatprep.subr.mxu0 0.0
    %106 = vmatpush1.msra.mxu0 0.0
    %107 = vmatprep.subr.mxu0 0.0
    %108 = vmatpush1.msra.mxu0 0.0
    %109 = vmatprep.subr.mxu0 0.0
    %110 = vmatpush1.msra.mxu0 0.0
    %111 = vmatprep.subr.mxu0 0.0
    %112 = vmatpush1.msra.mxu0 0.0
    %113 = vmatprep.subr.mxu0 0.0
    %114 = vmatpush1.msra.mxu0 0.0
    %115 = vmatprep.subr.mxu0 0.0
    %116 = vmatpush1.msra.mxu0 0.0
    %117 = vmatprep.subr.mxu0 0.0
    %118 = vmatpush1.msra.mxu0 0.0
    %119 = vmatprep.subr.mxu0 0.0
    %120 = vmatpush1.msra.mxu0 0.0
    %121 = vmatprep.subr.mxu0 0.0
    %122 = vmatpush1.msra.mxu0 0.0
    %123 = vmatprep.subr.mxu0 0.0
    %124 = vmatpush1.msra.mxu0 0.0
    %125 = vmatprep.subr.mxu0 0.0
    %126 = vmatpush1.msra.mxu0 0.0
    %127 = vmatprep.mubr.f32.mxu0 0.0
    %128 = vmatmul.mubr.f32.gmra.mrb[0].mxu0 %v58
    %v129 = vpop.f32.mrb[0].mxu0
    %v130 = vadd.f32 0.0, %v129
    %v131 = vpop.f32.mrb[0].mxu0
    %132 = vmatprep.mubr.f32.mxu0 0.0
    %133 = vmatmul.mubr.f32.gmra.mrb[0].mxu0 %v61
    %v134 = vpop.f32.mrb[0].mxu0
    %v135 = vadd.f32 0.0, %v134
    %v136 = vpop.f32.mrb[0].mxu0
    %137 = vdwg.mxu0
    %v138 = vld [vmem:[%s2] sm:$0x1]
    %v140 = vlaneseq
    %v141 = vshrl.u32 %v140, 7
    %v142 = vsub.s32 0, %v141
    %v143 = vrot.slane %v138, %v142
    %v145 = vmul.f32 %v130, %v143
    %v146 = vmul.f32 %v135, %v143
    %v147 = vld [vmem:[%s3] sm:$0x1]
    %v149 = vlaneseq
    %v150 = vshrl.u32 %v149, 7
    %v151 = vsub.s32 0, %v150
    %v152 = vrot.slane %v147, %v151
    %v154 = vadd.f32 %v145, %v152
    %v155 = vadd.f32 %v146, %v152
    %vm156 = vcmp.gt.f32.partialorder %v154, 0.0
    %vm157 = vcmp.gt.f32.partialorder %v155, 0.0
    %v158 = vmin.f32 %v154, 0.0
    %v159 = vmin.f32 %v155, 0.0
    %v160 = vmul.f32 %v158, 1.442695
    %v161 = vpow.pop %v160
    %v162 = vmul.f32 %v159, 1.442695
    %v163 = vpow.pop %v162
    %v164 = vsub.f32 %v161, 1.0
    %v165 = vsub.f32 %v163, 1.0
    %v166 = vsel %vm156, %v154, %v164
    %v167 = vsel %vm157, %v155, %v165
    %v168 = vld [vmem:[#allocation2] sm:$0xff]
    %v169 = vld [vmem:[#allocation2 + $0x8] sm:$0xff]
    %v170 = vld [vmem:[#allocation2 + $0x10] sm:$0xff]
    %v171 = vld [vmem:[#allocation2 + $0x18] sm:$0xff]
    %v173 = vsel %vm56, %v166, 0
    %v176 = vsel %vm56, %v167, 0
    %178 = vmatprep.subr.mxu0 0.0
    %179 = vmatpush1.msra.mxu0 %v168
    %180 = vmatprep.subr.mxu0 0.0
    %181 = vmatpush1.msra.mxu0 %v169
    %182 = vmatprep.subr.mxu0 0.0
    %183 = vmatpush1.msra.mxu0 %v170
    %184 = vmatprep.subr.mxu0 0.0
    %185 = vmatpush1.msra.mxu0 %v171
    %186 = vmatprep.subr.mxu0 0.0
    %187 = vmatpush1.msra.mxu0 0.0
    %188 = vmatprep.subr.mxu0 0.0
    %189 = vmatpush1.msra.mxu0 0.0
    %190 = vmatprep.subr.mxu0 0.0
    %191 = vmatpush1.msra.mxu0 0.0
    %192 = vmatprep.subr.mxu0 0.0
    %193 = vmatpush1.msra.mxu0 0.0
    %194 = vmatprep.subr.mxu0 0.0
    %195 = vmatpush1.msra.mxu0 0.0
    %196 = vmatprep.subr.mxu0 0.0
    %197 = vmatpush1.msra.mxu0 0.0
    %198 = vmatprep.subr.mxu0 0.0
    %199 = vmatpush1.msra.mxu0 0.0
    %200 = vmatprep.subr.mxu0 0.0
    %201 = vmatpush1.msra.mxu0 0.0
    %202 = vmatprep.subr.mxu0 0.0
    %203 = vmatpush1.msra.mxu0 0.0
    %204 = vmatprep.subr.mxu0 0.0
    %205 = vmatpush1.msra.mxu0 0.0
    %206 = vmatprep.subr.mxu0 0.0
    %207 = vmatpush1.msra.mxu0 0.0
    %208 = vmatprep.subr.mxu0 0.0
    %209 = vmatpush1.msra.mxu0 0.0
    %210 = vmatprep.subr.mxu0 0.0
    %211 = vmatpush1.msra.mxu0 0.0
    %212 = vmatprep.subr.mxu0 0.0
    %213 = vmatpush1.msra.mxu0 0.0
    %214 = vmatprep.subr.mxu0 0.0
    %215 = vmatpush1.msra.mxu0 0.0
    %216 = vmatprep.subr.mxu0 0.0
    %217 = vmatpush1.msra.mxu0 0.0
    %218 = vmatprep.subr.mxu0 0.0
    %219 = vmatpush1.msra.mxu0 0.0
    %220 = vmatprep.subr.mxu0 0.0
    %221 = vmatpush1.msra.mxu0 0.0
    %222 = vmatprep.subr.mxu0 0.0
    %223 = vmatpush1.msra.mxu0 0.0
    %224 = vmatprep.subr.mxu0 0.0
    %225 = vmatpush1.msra.mxu0 0.0
    %226 = vmatprep.subr.mxu0 0.0
    %227 = vmatpush1.msra.mxu0 0.0
    %228 = vmatprep.subr.mxu0 0.0
    %229 = vmatpush1.msra.mxu0 0.0
    %230 = vmatprep.subr.mxu0 0.0
    %231 = vmatpush1.msra.mxu0 0.0
    %232 = vmatprep.subr.mxu0 0.0
    %233 = vmatpush1.msra.mxu0 0.0
    %234 = vmatprep.subr.mxu0 0.0
    %235 = vmatpush1.msra.mxu0 0.0
    %236 = vmatprep.subr.mxu0 0.0
    %237 = vmatpush1.msra.mxu0 0.0
    %238 = vmatprep.subr.mxu0 0.0
    %239 = vmatpush1.msra.mxu0 0.0
    %240 = vmatprep.subr.mxu0 0.0
    %241 = vmatpush1.msra.mxu0 0.0
    %242 = vmatprep.mubr.f32.mxu0 0.0
    %243 = vmatmul.mubr.f32.gmra.mrb[0].mxu0 %v173
    %v244 = vpop.f32.mrb[0].mxu0
    %v245 = vadd.f32 0.0, %v244
    %v246 = vpop.f32.mrb[0].mxu0
    %247 = vmatprep.mubr.f32.mxu0 0.0
    %248 = vmatmul.mubr.f32.gmra.mrb[0].mxu0 %v176
    %v249 = vpop.f32.mrb[0].mxu0
    %v250 = vadd.f32 0.0, %v249
    %v251 = vpop.f32.mrb[0].mxu0
    %252 = vdwg.mxu0
    %v253 = vld [vmem:[%s5] sm:$0x1]
    %v255 = vlaneseq
    %v256 = vshrl.u32 %v255, 7
    %v257 = vsub.s32 0, %v256
    %v258 = vrot.slane %v253, %v257
    %v260 = vmul.f32 %v245, %v258
    %v261 = vmul.f32 %v250, %v258
    %v262 = vld [vmem:[%s6] sm:$0x1]
    %v264 = vlaneseq
    %v265 = vshrl.u32 %v264, 7
    %v266 = vsub.s32 0, %v265
    %v267 = vrot.slane %v262, %v266
    %v269 = vadd.f32 %v260, %v267
    %v270 = vadd.f32 %v261, %v267
    %vm271 = vcmp.gt.f32.partialorder %v269, 0.0
    %vm272 = vcmp.gt.f32.partialorder %v270, 0.0
    %v273 = vmin.f32 %v269, 0.0
    %v274 = vmin.f32 %v270, 0.0
    %v275 = vmul.f32 %v273, 1.442695
    %v276 = vpow.pop %v275
    %v277 = vmul.f32 %v274, 1.442695
    %v278 = vpow.pop %v277
    %v279 = vsub.f32 %v276, 1.0
    %v280 = vsub.f32 %v278, 1.0
    %v281 = vsel %vm271, %v269, %v279
    %v282 = vsel %vm272, %v270, %v280
    %v283 = vld [vmem:[%s7] sm:$0xff]
    %v284 = vld [vmem:[%s7 + $0x8] sm:$0xff]
    %v285 = vld [vmem:[%s7 + $0x10] sm:$0xff]
    %v286 = vld [vmem:[%s7 + $0x18] sm:$0xff]
    %v288 = vsel %vm56, %v281, 0
    %v291 = vsel %vm56, %v282, 0
    %293 = vmatprep.subr.mxu0 0.0
    %294 = vmatpush1.msra.mxu0 %v283
    %295 = vmatprep.subr.mxu0 0.0
    %296 = vmatpush1.msra.mxu0 %v284
    %297 = vmatprep.subr.mxu0 0.0
    %298 = vmatpush1.msra.mxu0 %v285
    %299 = vmatprep.subr.mxu0 0.0
    %300 = vmatpush1.msra.mxu0 %v286
    %301 = vmatprep.subr.mxu0 0.0
    %302 = vmatpush1.msra.mxu0 0.0
    %303 = vmatprep.subr.mxu0 0.0
    %304 = vmatpush1.msra.mxu0 0.0
    %305 = vmatprep.subr.mxu0 0.0
    %306 = vmatpush1.msra.mxu0 0.0
    %307 = vmatprep.subr.mxu0 0.0
    %308 = vmatpush1.msra.mxu0 0.0
    %309 = vmatprep.subr.mxu0 0.0
    %310 = vmatpush1.msra.mxu0 0.0
    %311 = vmatprep.subr.mxu0 0.0
    %312 = vmatpush1.msra.mxu0 0.0
    %313 = vmatprep.subr.mxu0 0.0
    %314 = vmatpush1.msra.mxu0 0.0
    %315 = vmatprep.subr.mxu0 0.0
    %316 = vmatpush1.msra.mxu0 0.0
    %317 = vmatprep.subr.mxu0 0.0
    %318 = vmatpush1.msra.mxu0 0.0
    %319 = vmatprep.subr.mxu0 0.0
    %320 = vmatpush1.msra.mxu0 0.0
    %321 = vmatprep.subr.mxu0 0.0
    %322 = vmatpush1.msra.mxu0 0.0
    %323 = vmatprep.subr.mxu0 0.0
    %324 = vmatpush1.msra.mxu0 0.0
    %325 = vmatprep.subr.mxu0 0.0
    %326 = vmatpush1.msra.mxu0 0.0
    %327 = vmatprep.subr.mxu0 0.0
    %328 = vmatpush1.msra.mxu0 0.0
    %329 = vmatprep.subr.mxu0 0.0
    %330 = vmatpush1.msra.mxu0 0.0
    %331 = vmatprep.subr.mxu0 0.0
    %332 = vmatpush1.msra.mxu0 0.0
    %333 = vmatprep.subr.mxu0 0.0
    %334 = vmatpush1.msra.mxu0 0.0
    %335 = vmatprep.subr.mxu0 0.0
    %336 = vmatpush1.msra.mxu0 0.0
    %337 = vmatprep.subr.mxu0 0.0
    %338 = vmatpush1.msra.mxu0 0.0
    %339 = vmatprep.subr.mxu0 0.0
    %340 = vmatpush1.msra.mxu0 0.0
    %341 = vmatprep.subr.mxu0 0.0
    %342 = vmatpush1.msra.mxu0 0.0
    %343 = vmatprep.subr.mxu0 0.0
    %344 = vmatpush1.msra.mxu0 0.0
    %345 = vmatprep.subr.mxu0 0.0
    %346 = vmatpush1.msra.mxu0 0.0
    %347 = vmatprep.subr.mxu0 0.0
    %348 = vmatpush1.msra.mxu0 0.0
    %349 = vmatprep.subr.mxu0 0.0
    %350 = vmatpush1.msra.mxu0 0.0
    %351 = vmatprep.subr.mxu0 0.0
    %352 = vmatpush1.msra.mxu0 0.0
    %353 = vmatprep.subr.mxu0 0.0
    %354 = vmatpush1.msra.mxu0 0.0
    %355 = vmatprep.subr.mxu0 0.0
    %356 = vmatpush1.msra.mxu0 0.0
    %357 = vmatprep.mubr.f32.mxu0 0.0
    %358 = vmatmul.mubr.f32.gmra.mrb[0].mxu0 %v288
    %v359 = vpop.f32.mrb[0].mxu0
    %v360 = vadd.f32 0.0, %v359
    %v361 = vpop.f32.mrb[0].mxu0
    %362 = vmatprep.mubr.f32.mxu0 0.0
    %363 = vmatmul.mubr.f32.gmra.mrb[0].mxu0 %v291
    %v364 = vpop.f32.mrb[0].mxu0
    %v365 = vadd.f32 0.0, %v364
    %v366 = vpop.f32.mrb[0].mxu0
    %367 = vdwg.mxu0
    %v368 = vld [vmem:[%s8] sm:$0x1]
    %v370 = vlaneseq
    %v371 = vshrl.u32 %v370, 7
    %v372 = vsub.s32 0, %v371
    %v373 = vrot.slane %v368, %v372
    %v375 = vmul.f32 %v360, %v373
    %v376 = vmul.f32 %v365, %v373
    %v377 = vld [vmem:[%s9] sm:$0x1]
    %v379 = vlaneseq
    %v380 = vshrl.u32 %v379, 7
    %v381 = vsub.s32 0, %v380
    %v382 = vrot.slane %v377, %v381
    %v384 = vadd.f32 %v375, %v382
    %v385 = vadd.f32 %v376, %v382
    %vm386 = vcmp.gt.f32.partialorder %v384, 0.0
    %vm387 = vcmp.gt.f32.partialorder %v385, 0.0
    %v388 = vmin.f32 %v384, 0.0
    %v389 = vmin.f32 %v385, 0.0
    %v390 = vmul.f32 %v388, 1.442695
    %v391 = vpow.pop %v390
    %v392 = vmul.f32 %v389, 1.442695
    %v393 = vpow.pop %v392
    %v394 = vsub.f32 %v391, 1.0
    %v395 = vsub.f32 %v393, 1.0
    %v396 = vsel %vm386, %v384, %v394
    %v397 = vsel %vm387, %v385, %v395
    %v398 = vmul.f32 %v396, %v396
    %v399 = vmul.f32 %v397, %v397
    %vm400 = vcmask 130048
    %v401 = vsel %vm400, %v398, 0.0
    %402 = vadd.xlane.f32.xlu0 %v401
    %v403 = vpop.xlane.xlu0 %402
    %v404 = vsel %vm400, %v399, 0.0
    %405 = vadd.xlane.f32.xlu0 %v404
    %v406 = vpop.xlane.xlu0 %405
    %v407 = vrsqrt.pop %v403
    %v408 = vmul.f32 %v403, %v407
    %vm409 = vcmp.eq.f32.partialorder %v403, inf
    %v410 = vsel %vm409, %v403, %v408
    %vm411 = vcmp.eq.f32.partialorder %v403, 0.0
    %v412 = vand.u32 %v403, 2147483648
    %v413 = vsel %vm411, %v412, %v410
    %v414 = vrsqrt.pop %v406
    %v415 = vmul.f32 %v406, %v414
    %vm416 = vcmp.eq.f32.partialorder %v406, inf
    %v417 = vsel %vm416, %v406, %v415
    %vm418 = vcmp.eq.f32.partialorder %v406, 0.0
    %v419 = vand.u32 %v406, 2147483648
    %v420 = vsel %vm418, %v419, %v417
    %v421 = vadd.f32 %v413, 1e-08
    %v422 = vadd.f32 %v420, 1e-08
    %v423 = vrcp.pop %v421
    %v424 = vmul.f32 10.0, %v423
    %v425 = vrcp.pop %v422
    %v426 = vmul.f32 10.0, %v425
    %v427 = vmul.f32 %v396, %v424
    %v428 = vmul.f32 %v397, %v426
    %429 = vst.msk [vmem:[#allocation5] sm:$0xff] %vm400, %v427
    %430 = vst.msk [vmem:[#allocation5 + $0x8] sm:$0xff] %vm400, %v428
    // Predicated region
    $region46: #{tpu_custom_call.1} parent=1 // pred_check
      _
    $region47: #{tpu_custom_call.1} parent=1 // pred_check_branch
      %432 = sbr.rel (0) target = $region49
    $region48: #{tpu_custom_call.1} parent=1 // pred_region
      %s434 = ssub.s32 256, 256
      %435 = vsyncadd [#allocation4], %s434
      %s436 = sshll.u32 [#allocation5], 4
      %s437 = int_to_ptr.vmem [resolvable:$true] %s436
      %442 = dma.vmem_to_hbm [thread:$0]  %s437, 256, %s10, [#allocation4], 128, 128, 8
    $region49: #{tpu_custom_call.1} parent=1 // pred_fallthru
      _
    // Predicated region
    $region50: #{tpu_custom_call.1} parent=1 // pred_check
      _
    $region51: #{tpu_custom_call.1} parent=1 // pred_check_branch
      %444 = sbr.rel (0) target = $region53
    $region52: #{tpu_custom_call.1} parent=1 // pred_region
      %445 = dma.done [#allocation4], 256
    $region53: #{tpu_custom_call.1} parent=1 // pred_fallthru
      _
    %446 = vsyncpa [#allocation3], 1
    %447 = vsyncpa [#allocation4], 1

</llo_original>
